<compile_context>
chip_gen: v6e
topology: v6e:2x2x1
jax: 0.10.0
libtpu: 0.0.40
codegen_flags: <defaults>
</compile_context>

<pallas_src>
import functools

import jax
import jax.numpy as jnp
import numpy as np
from jax.experimental import pallas as pl
from jax.experimental.pallas import tpu as pltpu

BN_EPS = 1e-5
NEG_SLOPE = 0.1
_VMEM_LIMIT = 64 * 1024 * 1024  # > 32 MiB scoped default, fits v7x's 64 MiB VMEM


def _pick_tile_l(length, cap):
    """Largest lane-dense (multiple-of-128) divisor of `length` <= cap, falling
    back to the full length (single tile) when none exists (e.g. tiny L)."""
    if length <= cap:
        return length
    t = (cap // 128) * 128
    while t >= 128:
        if length % t == 0:
            return t
        t -= 128
    return length


def _conv_stats_kernel(x_ref, w_ref, y_ref, sum_ref, sumsq_ref, *,
                       kernel_size, tile_l):
    """Phase 1, grid = (N, L/tile_l): conv tile + fused batch statistics.

    x_ref:     (C_in_p, tile_l + K - 1)  zero-padded input window (one sample)
    w_ref:     (C_out, K * C_in_p)       tap-stacked conv weight
    y_ref:     (C_out, tile_l)           conv output tile (no bias: BN cancels it)
    sum_ref:   (C_out, 1)                per-channel sum   (VMEM-resident accumulator)
    sumsq_ref: (C_out, 1)                per-channel sum of squares (accumulator)
    """
    K = kernel_size
    TL = tile_l

    @pl.when(jnp.logical_and(pl.program_id(0) == 0, pl.program_id(1) == 0))
    def _init():
        sum_ref[...] = jnp.zeros_like(sum_ref)
        sumsq_ref[...] = jnp.zeros_like(sumsq_ref)

    # Load the padded window once; derive the K shifted tap views from the
    # in-register value instead of K overlapping unaligned ref loads.
    x_blk = x_ref[...]                                              # (C_in_p, TL+K-1)
    stacked = jnp.concatenate([x_blk[:, t:t + TL] for t in range(K)], axis=0)
    # Single MXU matmul per tile: contraction over K * C_in_p (taps x channels).
    y = jnp.dot(w_ref[...], stacked, preferred_element_type=jnp.float32)
    y_ref[...] = y                                                  # (C_out, TL)

    # Fused statistics (Var = E[x^2] - mean^2), accumulated in f32.
    sum_ref[...] += jnp.sum(y, axis=1, keepdims=True)
    sumsq_ref[...] += jnp.sum(y * y, axis=1, keepdims=True)


def _bn_lrelu_kernel(scale_ref, shift_ref, y_ref, o_ref):
    """Phase 2, grid = (L/tile_l,): normalize + LeakyReLU(0.1), in place."""
    z = y_ref[...] * scale_ref[...] + shift_ref[...]   # (N,C_out,TL)*(1,C_out,1)
    o_ref[...] = jnp.where(z >= 0.0, z, NEG_SLOPE * z)


def upsampling_layer(x, weight, bias, gamma, beta, *, kernel_size=5, padding=2,
                     max_tile_l=1024):
    """x: (N, C_in, L) f32; weight: (C_out, C_in, K); bias/gamma/beta: (C_out,).

    Matches PyTorch Conv1d('same') -> BatchNorm1d(training) -> LeakyReLU(0.1).
    """
    n, c_in, length = x.shape
    c_out = weight.shape[0]
    K = kernel_size
    if 2 * padding != K - 1:
        raise ValueError("kernel assumes 'same' padding: 2*padding == kernel_size-1")

    # Conv bias dropped on purpose: the batch-mean subtraction of training-mode
    # BatchNorm cancels a per-channel constant exactly.  Kept for API parity.
    del bias

    tile_l = _pick_tile_l(length, max_tile_l)
    num_tiles = length // tile_l
    win = tile_l + K - 1

    # ---- layout plumbing (plain JAX glue) -----------------------------------
    # Pad channels to a sublane multiple; pad length for 'same' convolution.
    c_in_p = ((c_in + 7) // 8) * 8
    x_pad = jnp.pad(x.astype(jnp.float32),
                    ((0, 0), (0, c_in_p - c_in), (padding, padding)))
    # Overlapping per-(sample, tile) windows: (N, num_tiles, C_in_p, win).
    if num_tiles == 1:
        x_win = x_pad[:, None]
    else:
        starts = jnp.arange(num_tiles) * tile_l
        x_win = jax.vmap(lambda xs: jax.vmap(
            lambda s: jax.lax.dynamic_slice(xs, (0, s), (c_in_p, win)))(starts))(x_pad)

    # Tap-stacked weight: w2[o, t*C_in_p + c] = weight[o, c, t]  -> (C_out, K*C_in_p)
    w2 = jnp.pad(jnp.transpose(weight.astype(jnp.float32), (0, 2, 1)),
                 ((0, 0), (0, 0), (0, c_in_p - c_in))).reshape(c_out, K * c_in_p)

    # ---- phase 1: conv + fused per-channel sum / sum-of-squares -------------
    conv_kernel = functools.partial(_conv_stats_kernel, kernel_size=K, tile_l=tile_l)
    y, ssum, ssq = pl.pallas_call(
        conv_kernel,
        out_shape=(
            jax.ShapeDtypeStruct((n, c_out, length), jnp.float32),
            jax.ShapeDtypeStruct((c_out, 1), jnp.float32),
            jax.ShapeDtypeStruct((c_out, 1), jnp.float32),
        ),
        grid_spec=pltpu.PrefetchScalarGridSpec(
            num_scalar_prefetch=0,
            grid=(n, num_tiles),
            in_specs=[
                pl.BlockSpec((None, None, c_in_p, win), lambda b, j: (b, j, 0, 0)),
                pl.BlockSpec((c_out, K * c_in_p), lambda b, j: (0, 0)),
            ],
            out_specs=[
                pl.BlockSpec((None, c_out, tile_l), lambda b, j: (b, 0, j)),
                pl.BlockSpec((c_out, 1), lambda b, j: (0, 0)),
                pl.BlockSpec((c_out, 1), lambda b, j: (0, 0)),
            ],
        ),
        # Both axes "arbitrary": the stats outputs are grid-resident accumulators
        # (a "parallel" axis would race two cores on the same accumulator).
        compiler_params=pltpu.CompilerParams(
            dimension_semantics=("arbitrary", "arbitrary"),
            vmem_limit_bytes=_VMEM_LIMIT),
    )(x_win, w2)

    # ---- tiny per-channel glue between the two phases (C_out scalars) -------
    count = jnp.float32(n * length)
    mean = ssum / count                            # (C_out, 1)
    var = ssq / count - mean * mean                # biased variance (BN training mode)
    inv_std = jax.lax.rsqrt(var + BN_EPS)
    g2 = gamma.reshape(c_out, 1).astype(jnp.float32)
    b2 = beta.reshape(c_out, 1).astype(jnp.float32)
    scale = (g2 * inv_std).reshape(1, c_out, 1)
    shift = (b2 - mean * g2 * inv_std).reshape(1, c_out, 1)

    # ---- phase 2: normalize + LeakyReLU, in place over lane-dense L tiles ---
    out = pl.pallas_call(
        _bn_lrelu_kernel,
        out_shape=jax.ShapeDtypeStruct((n, c_out, length), jnp.float32),
        grid_spec=pltpu.PrefetchScalarGridSpec(
            num_scalar_prefetch=0,
            grid=(num_tiles,),
            in_specs=[
                pl.BlockSpec((1, c_out, 1), lambda j: (0, 0, 0)),
                pl.BlockSpec((1, c_out, 1), lambda j: (0, 0, 0)),
                pl.BlockSpec((n, c_out, tile_l), lambda j: (0, 0, j)),
            ],
            out_specs=pl.BlockSpec((n, c_out, tile_l), lambda j: (0, 0, j)),
        ),
        compiler_params=pltpu.CompilerParams(
            dimension_semantics=("parallel",),
            vmem_limit_bytes=_VMEM_LIMIT),
        input_output_aliases={2: 0},   # normalize the conv buffer in place
    )(scale, shift, y)

    return out


def _reference(x, weight, bias, gamma, beta, padding=2):
    """Pure-JAX reference matching PyTorch Conv1d + BatchNorm1d(train) + LeakyReLU."""
    y = jax.lax.conv_general_dilated(
        x, weight, window_strides=(1,), padding=[(padding, padding)],
        dimension_numbers=("NCH", "OIH", "NCH"))
    y = y + bias[None, :, None]
    mean = y.mean(axis=(0, 2), keepdims=True)
    var = ((y - mean) ** 2).mean(axis=(0, 2), keepdims=True)
    yn = (y - mean) / jnp.sqrt(var + BN_EPS)
    yn = yn * gamma[None, :, None] + beta[None, :, None]
    return jnp.where(yn >= 0, yn, NEG_SLOPE * yn)


if __name__ == "__main__":
    # Small shapes consistent with the module's forward
    N, C_IN, C_OUT, L, K, PAD = 2, 4, 8, 16, 5, 2

    key = jax.random.PRNGKey(0)
    kx, kw, kb = jax.random.split(key, 3)

    x = jax.random.normal(kx, (N, C_IN, L), dtype=jnp.float32)
    # Deterministic parameter init (synthetic, PyTorch-like fan-in scaling)
    fan_in = C_IN * K
    bound = 1.0 / np.sqrt(fan_in)
    weight = jax.random.uniform(kw, (C_OUT, C_IN, K), jnp.float32, -bound, bound)
    bias = jax.random.uniform(kb, (C_OUT,), jnp.float32, -bound, bound)
    gamma = jnp.ones((C_OUT,), jnp.float32)   # BatchNorm1d default init
    beta = jnp.zeros((C_OUT,), jnp.float32)

    fwd = jax.jit(lambda xx, ww, bb, gg, be: upsampling_layer(
        xx, ww, bb, gg, be, kernel_size=K, padding=PAD))
    out = jax.block_until_ready(fwd(x, weight, bias, gamma, beta))

    ref = _reference(x, weight, bias, gamma, beta, padding=PAD)
    np.testing.assert_allclose(np.asarray(out), np.asarray(ref), rtol=1e-4, atol=1e-5)

    print("KERNEL_OK")
</pallas_src>

<mosaic_0001>
module attributes {stable_mosaic.version = 11 : i64} {
  func.func @_conv_stats_kernel(%arg0: i32, %arg1: i32, %arg2: memref<1x1x8x20xf32, #tpu.memory_space<vmem>>, %arg3: memref<8x40xf32, #tpu.memory_space<vmem>>, %arg4: memref<1x8x16xf32, #tpu.memory_space<vmem>>, %arg5: memref<8x1xf32, #tpu.memory_space<vmem>>, %arg6: memref<8x1xf32, #tpu.memory_space<vmem>>) attributes {dimension_semantics = [#tpu.dimension_semantics<arbitrary>, #tpu.dimension_semantics<arbitrary>], iteration_bounds = array<i64: 2, 1>, scalar_prefetch = 0 : i64, scratch_operands = 0 : i64, tpu.core_type = #tpu.core_type<tc>, window_params = [{transform_indices = @transform_0, window_bounds = array<i64: 1, 1, 8, 20>}, {pipeline_mode = #tpu.pipeline_mode<synchronous>, transform_indices = @transform_1, window_bounds = array<i64: 8, 40>}, {transform_indices = @transform_2, window_bounds = array<i64: 1, 8, 16>}, {pipeline_mode = #tpu.pipeline_mode<synchronous>, transform_indices = @transform_3, window_bounds = array<i64: 8, 1>}, {pipeline_mode = #tpu.pipeline_mode<synchronous>, transform_indices = @transform_4, window_bounds = array<i64: 8, 1>}]} {
    %c0_i32 = arith.constant 0 : i32
    %0 = arith.cmpi eq, %arg0, %c0_i32 : i32
    %c0_i32_0 = arith.constant 0 : i32
    %1 = arith.cmpi eq, %arg1, %c0_i32_0 : i32
    %2 = arith.andi %0, %1 : i1
    %3 = arith.extui %2 : i1 to i32
    %c0_i32_1 = arith.constant 0 : i32
    %4 = arith.cmpi ne, %3, %c0_i32_1 : i32
    scf.if %4 {
      %cst_20 = arith.constant 0.000000e+00 : f32
      %29 = vector.broadcast %cst_20 : f32 to vector<8x1xf32>
      %c0_21 = arith.constant 0 : index
      %c0_22 = arith.constant 0 : index
      %30 = vector.load %arg5[%c0_21, %c0_22] : memref<8x1xf32, #tpu.memory_space<vmem>>, vector<8x1xf32>
      tpu.vector_store %arg5[%c0_21, %c0_22], %29 {strides = array<i32>} : memref<8x1xf32, #tpu.memory_space<vmem>>, vector<8x1xf32>,
      %cst_23 = arith.constant 0.000000e+00 : f32
      %31 = vector.broadcast %cst_23 : f32 to vector<8x1xf32>
      %c0_24 = arith.constant 0 : index
      %c0_25 = arith.constant 0 : index
      %32 = vector.load %arg6[%c0_24, %c0_25] : memref<8x1xf32, #tpu.memory_space<vmem>>, vector<8x1xf32>
      tpu.vector_store %arg6[%c0_24, %c0_25], %31 {strides = array<i32>} : memref<8x1xf32, #tpu.memory_space<vmem>>, vector<8x1xf32>,
    } else {
    }
    %c0 = arith.constant 0 : index
    %c0_2 = arith.constant 0 : index
    %c0_3 = arith.constant 0 : index
    %c0_4 = arith.constant 0 : index
    %5 = vector.load %arg2[%c0, %c0_2, %c0_3, %c0_4] : memref<1x1x8x20xf32, #tpu.memory_space<vmem>>, vector<1x1x8x20xf32>
    %6 = vector.shape_cast %5 : vector<1x1x8x20xf32> to vector<8x20xf32>
    %7 = vector.extract_strided_slice %6 {offsets = [0, 0], sizes = [8, 16], strides = [1, 1]} : vector<8x20xf32> to vector<8x16xf32>
    %8 = vector.extract_strided_slice %6 {offsets = [0, 1], sizes = [8, 16], strides = [1, 1]} : vector<8x20xf32> to vector<8x16xf32>
    %9 = vector.extract_strided_slice %6 {offsets = [0, 2], sizes = [8, 16], strides = [1, 1]} : vector<8x20xf32> to vector<8x16xf32>
    %10 = vector.extract_strided_slice %6 {offsets = [0, 3], sizes = [8, 16], strides = [1, 1]} : vector<8x20xf32> to vector<8x16xf32>
    %11 = vector.extract_strided_slice %6 {offsets = [0, 4], sizes = [8, 16], strides = [1, 1]} : vector<8x20xf32> to vector<8x16xf32>
    %12 = tpu.concatenate %7, %8, %9, %10, %11 in 0 : vector<8x16xf32>, vector<8x16xf32>, vector<8x16xf32>, vector<8x16xf32>, vector<8x16xf32> -> vector<40x16xf32>
    %c0_5 = arith.constant 0 : index
    %c0_6 = arith.constant 0 : index
    %13 = vector.load %arg3[%c0_5, %c0_6] : memref<8x40xf32, #tpu.memory_space<vmem>>, vector<8x40xf32>
    %cst = arith.constant dense<0.000000e+00> : vector<8x16xf32>
    %14 = tpu.matmul %13, %12, %cst {dimension_numbers = #tpu.dot_dimension_numbers<[1], [0], [0], [1], [0, 0, 1, 1], [], []>} : vector<8x40xf32>, vector<40x16xf32>, vector<8x16xf32> -> vector<8x16xf32>
    %c0_7 = arith.constant 0 : index
    %c0_8 = arith.constant 0 : index
    %c0_9 = arith.constant 0 : index
    %15 = vector.load %arg4[%c0_7, %c0_8, %c0_9] : memref<1x8x16xf32, #tpu.memory_space<vmem>>, vector<1x8x16xf32>
    %16 = vector.shape_cast %15 : vector<1x8x16xf32> to vector<8x16xf32>
    %17 = vector.shape_cast %14 : vector<8x16xf32> to vector<1x8x16xf32>
    tpu.vector_store %arg4[%c0_7, %c0_8, %c0_9], %17 {strides = array<i32>} : memref<1x8x16xf32, #tpu.memory_space<vmem>>, vector<1x8x16xf32>,
    %c0_10 = arith.constant 0 : index
    %c0_11 = arith.constant 0 : index
    %18 = vector.load %arg5[%c0_10, %c0_11] : memref<8x1xf32, #tpu.memory_space<vmem>>, vector<8x1xf32>
    %cst_12 = arith.constant dense<0.000000e+00> : vector<8xf32>
    %19 = vector.multi_reduction <add>, %14, %cst_12 [1] : vector<8x16xf32> to vector<8xf32>
    %20 = vector.shape_cast %19 : vector<8xf32> to vector<8x1xf32>
    %21 = arith.addf %18, %20 : vector<8x1xf32>
    %c0_13 = arith.constant 0 : index
    %c0_14 = arith.constant 0 : index
    %22 = vector.load %arg5[%c0_13, %c0_14] : memref<8x1xf32, #tpu.memory_space<vmem>>, vector<8x1xf32>
    tpu.vector_store %arg5[%c0_13, %c0_14], %21 {strides = array<i32>} : memref<8x1xf32, #tpu.memory_space<vmem>>, vector<8x1xf32>,
    %c0_15 = arith.constant 0 : index
    %c0_16 = arith.constant 0 : index
    %23 = vector.load %arg6[%c0_15, %c0_16] : memref<8x1xf32, #tpu.memory_space<vmem>>, vector<8x1xf32>
    %24 = arith.mulf %14, %14 : vector<8x16xf32>
    %cst_17 = arith.constant dense<0.000000e+00> : vector<8xf32>
    %25 = vector.multi_reduction <add>, %24, %cst_17 [1] : vector<8x16xf32> to vector<8xf32>
    %26 = vector.shape_cast %25 : vector<8xf32> to vector<8x1xf32>
    %27 = arith.addf %23, %26 : vector<8x1xf32>
    %c0_18 = arith.constant 0 : index
    %c0_19 = arith.constant 0 : index
    %28 = vector.load %arg6[%c0_18, %c0_19] : memref<8x1xf32, #tpu.memory_space<vmem>>, vector<8x1xf32>
    tpu.vector_store %arg6[%c0_18, %c0_19], %27 {strides = array<i32>} : memref<8x1xf32, #tpu.memory_space<vmem>>, vector<8x1xf32>,
    return
  }
  func.func @transform_0(%arg0: i32, %arg1: i32) -> (i32, i32, i32, i32) {
    %c0_i32 = arith.constant 0 : i32
    %c0_i32_0 = arith.constant 0 : i32
    %c0_i32_1 = arith.constant 0 : i32
    return %arg0, %arg1, %c0_i32, %c0_i32_0 : i32, i32, i32, i32
  }
  func.func @transform_1(%arg0: i32, %arg1: i32) -> (i32, i32) {
    %c0_i32 = arith.constant 0 : i32
    %c0_i32_0 = arith.constant 0 : i32
    %c0_i32_1 = arith.constant 0 : i32
    return %c0_i32, %c0_i32_0 : i32, i32
  }
  func.func @transform_2(%arg0: i32, %arg1: i32) -> (i32, i32, i32) {
    %c0_i32 = arith.constant 0 : i32
    %c0_i32_0 = arith.constant 0 : i32
    return %arg0, %c0_i32, %arg1 : i32, i32, i32
  }
  func.func @transform_3(%arg0: i32, %arg1: i32) -> (i32, i32) {
    %c0_i32 = arith.constant 0 : i32
    %c0_i32_0 = arith.constant 0 : i32
    %c0_i32_1 = arith.constant 0 : i32
    return %c0_i32, %c0_i32_0 : i32, i32
  }
  func.func @transform_4(%arg0: i32, %arg1: i32) -> (i32, i32) {
    %c0_i32 = arith.constant 0 : i32
    %c0_i32_0 = arith.constant 0 : i32
    %c0_i32_1 = arith.constant 0 : i32
    return %c0_i32, %c0_i32_0 : i32, i32
  }
}

module attributes {stable_mosaic.version = 11 : i64} {
  func.func @_bn_lrelu_kernel(%arg0: i32, %arg1: memref<1x8x1xf32, #tpu.memory_space<vmem>>, %arg2: memref<1x8x1xf32, #tpu.memory_space<vmem>>, %arg3: memref<2x8x16xf32, #tpu.memory_space<vmem>>, %arg4: memref<2x8x16xf32, #tpu.memory_space<vmem>>) attributes {dimension_semantics = [#tpu.dimension_semantics<parallel>], iteration_bounds = array<i64: 1>, scalar_prefetch = 0 : i64, scratch_operands = 0 : i64, tpu.core_type = #tpu.core_type<tc>, window_params = [{pipeline_mode = #tpu.pipeline_mode<synchronous>, transform_indices = @transform_0, window_bounds = array<i64: 1, 8, 1>}, {pipeline_mode = #tpu.pipeline_mode<synchronous>, transform_indices = @transform_1, window_bounds = array<i64: 1, 8, 1>}, {transform_indices = @transform_2, window_bounds = array<i64: 2, 8, 16>}, {transform_indices = @transform_3, window_bounds = array<i64: 2, 8, 16>}]} {
    %c0 = arith.constant 0 : index
    %c0_0 = arith.constant 0 : index
    %c0_1 = arith.constant 0 : index
    %0 = vector.load %arg3[%c0, %c0_0, %c0_1] : memref<2x8x16xf32, #tpu.memory_space<vmem>>, vector<2x8x16xf32>
    %c0_2 = arith.constant 0 : index
    %c0_3 = arith.constant 0 : index
    %c0_4 = arith.constant 0 : index
    %1 = vector.load %arg1[%c0_2, %c0_3, %c0_4] : memref<1x8x1xf32, #tpu.memory_space<vmem>>, vector<1x8x1xf32>
    %2 = vector.broadcast %1 : vector<1x8x1xf32> to vector<2x8x16xf32>
    %3 = arith.mulf %0, %2 : vector<2x8x16xf32>
    %c0_5 = arith.constant 0 : index
    %c0_6 = arith.constant 0 : index
    %c0_7 = arith.constant 0 : index
    %4 = vector.load %arg2[%c0_5, %c0_6, %c0_7] : memref<1x8x1xf32, #tpu.memory_space<vmem>>, vector<1x8x1xf32>
    %5 = vector.broadcast %4 : vector<1x8x1xf32> to vector<2x8x16xf32>
    %6 = arith.addf %3, %5 : vector<2x8x16xf32>
    %cst = arith.constant 0.000000e+00 : f32
    %7 = vector.broadcast %cst : f32 to vector<2x8x16xf32>
    %8 = arith.cmpf oge, %6, %7 : vector<2x8x16xf32>
    %cst_8 = arith.constant 1.000000e-01 : f32
    %9 = vector.broadcast %cst_8 : f32 to vector<2x8x16xf32>
    %10 = arith.mulf %9, %6 : vector<2x8x16xf32>
    %11 = arith.select %8, %6, %10 : vector<2x8x16xi1>, vector<2x8x16xf32>
    %c0_9 = arith.constant 0 : index
    %c0_10 = arith.constant 0 : index
    %c0_11 = arith.constant 0 : index
    %12 = vector.load %arg4[%c0_9, %c0_10, %c0_11] : memref<2x8x16xf32, #tpu.memory_space<vmem>>, vector<2x8x16xf32>
    tpu.vector_store %arg4[%c0_9, %c0_10, %c0_11], %11 {strides = array<i32>} : memref<2x8x16xf32, #tpu.memory_space<vmem>>, vector<2x8x16xf32>,
    return
  }
  func.func @transform_0(%arg0: i32) -> (i32, i32, i32) {
    %c0_i32 = arith.constant 0 : i32
    %c0_i32_0 = arith.constant 0 : i32
    %c0_i32_1 = arith.constant 0 : i32
    %c0_i32_2 = arith.constant 0 : i32
    return %c0_i32, %c0_i32_0, %c0_i32_1 : i32, i32, i32
  }
  func.func @transform_1(%arg0: i32) -> (i32, i32, i32) {
    %c0_i32 = arith.constant 0 : i32
    %c0_i32_0 = arith.constant 0 : i32
    %c0_i32_1 = arith.constant 0 : i32
    %c0_i32_2 = arith.constant 0 : i32
    return %c0_i32, %c0_i32_0, %c0_i32_1 : i32, i32, i32
  }
  func.func @transform_2(%arg0: i32) -> (i32, i32, i32) {
    %c0_i32 = arith.constant 0 : i32
    %c0_i32_0 = arith.constant 0 : i32
    %c0_i32_1 = arith.constant 0 : i32
    return %c0_i32, %c0_i32_0, %arg0 : i32, i32, i32
  }
  func.func @transform_3(%arg0: i32) -> (i32, i32, i32) {
    %c0_i32 = arith.constant 0 : i32
    %c0_i32_0 = arith.constant 0 : i32
    %c0_i32_1 = arith.constant 0 : i32
    return %c0_i32, %c0_i32_0, %arg0 : i32, i32, i32
  }
}

</mosaic_0001>

<llo_original>
// kernel: _lambda_.3
$region0: #{_lambda_.3}
  #allocation0 [shape = 'u32[]', space=smem, size = 0x4, offset = 0x4, fixed_abs, tag = 'smem constant byte address 0x4 - core index']
  #allocation1 [shape = 'u32[144,128]{1,0:T(1,128)}', space=vmem, size = 0x12000, scoped, tag = 'internal scratch']
  %s0 = inlined_call_operand.vmem [shape: f32[1,8,1], index: 0, kind: input, shape index: {}]
  %s1 = inlined_call_operand.vmem [shape: f32[1,8,1], index: 1, kind: input, shape index: {}]
  %s2 = inlined_call_operand.hbm [shape: f32[2,8,16], index: 2, kind: input, shape index: {}, may-alias: {2,3}]
  %s3 = inlined_call_operand.hbm [shape: f32[2,8,16], index: 3, kind: output, shape index: {}, may-alias: {2,3}]
  %s4 = sld [smem:[#allocation0]]
  $region26: #{_lambda_.3} parent=0
    _
  %s6 = ssub.s32 1, %s4
  %s7 = scalar_select 0, %s6, %s4
  $region1: #{_lambda_.3} parent=0
    #allocation2 [shape = 'u8[8192]{0}', space=vmem, size = 0x2000, scoped, tag = 'input window, operand 2, single buffered']
    #allocation3 [shape = 's32[1]{0}', space=sflag, size = 0x4, scoped, tag = 'scoped memory for _lambda_.3']
    #allocation4 [shape = 's32[1]{0}', space=sflag, size = 0x4, scoped, tag = 'scoped memory for _lambda_.3']
    #allocation5 [shape = 'u8[8192]{0}', space=vmem, size = 0x2000, scoped, tag = 'output window, operand 0, single buffered']
    %8 = vsyncpa [#allocation3], 0
    %9 = vsyncpa [#allocation4], 0
    // Predicated region
    $region2: #{_lambda_.3} parent=1 // pred_check
      _
    $region3: #{_lambda_.3} parent=1 // pred_check_branch
      %11 = sbr.rel (0) target = $region5
    $region4: #{_lambda_.3} parent=1 // pred_region
      _
    $region5: #{_lambda_.3} parent=1 // pred_fallthru
      _
    // Predicated region
    $region6: #{_lambda_.3} parent=1 // pred_check
      _
    $region7: #{_lambda_.3} parent=1 // pred_check_branch
      %13 = sbr.rel (0) target = $region9
    $region8: #{_lambda_.3} parent=1 // pred_region
      _
    $region9: #{_lambda_.3} parent=1 // pred_fallthru
      _
    // Predicated region
    $region10: #{_lambda_.3} parent=1 // pred_check
      _
    $region11: #{_lambda_.3} parent=1 // pred_check_branch
      %15 = sbr.rel (0) target = $region13
    $region12: #{_lambda_.3} parent=1 // pred_region
      %s17 = ssub.s32 256, 256
      %18 = vsyncadd [#allocation3], %s17
      %s19 = sshll.u32 [#allocation2], 4
      %s20 = int_to_ptr.vmem [resolvable:$true] %s19
      %25 = dma.hbm_to_vmem [thread:$0]  %s2, 256, %s20, [#allocation3], 128, 128, 8
    $region13: #{_lambda_.3} parent=1 // pred_fallthru
      _
    // Predicated region
    $region14: #{_lambda_.3} parent=1 // pred_check
      _
    $region15: #{_lambda_.3} parent=1 // pred_check_branch
      %27 = sbr.rel (0) target = $region17
    $region16: #{_lambda_.3} parent=1 // pred_region
      %28 = dma.done [#allocation3], 256
    $region17: #{_lambda_.3} parent=1 // pred_fallthru
      _
    %v29 = vld [vmem:[#allocation2] sm:$0xff]
    %v30 = vld [vmem:[#allocation2 + $0x8] sm:$0xff]
    %v31 = vld [vmem:[%s0] sm:$0xff]
    %33 = vset.pattern.permute.xlu0 0
    %34 = vperm.xlu0 %33, %v31
    %v35 = vpop.permute.xlu0 %34
    %v37 = vmul.f32 %v29, %v35
    %v38 = vmul.f32 %v30, %v35
    %v39 = vld [vmem:[%s1] sm:$0xff]
    %41 = vset.pattern.permute.xlu0 0
    %42 = vperm.xlu0 %41, %v39
    %v43 = vpop.permute.xlu0 %42
    %v45 = vadd.f32 %v37, %v43
    %v46 = vadd.f32 %v38, %v43
    %vm47 = vcmp.ge.f32.partialorder %v45, 0.0
    %vm48 = vcmp.ge.f32.partialorder %v46, 0.0
    %v49 = vmul.f32 %v45, 0.1
    %v50 = vmul.f32 %v46, 0.1
    %v51 = vsel %vm47, %v45, %v49
    %v52 = vsel %vm48, %v46, %v50
    %vm53 = vcmask 130048
    %54 = vst.msk [vmem:[#allocation5] sm:$0xff] %vm53, %v51
    %55 = vst.msk [vmem:[#allocation5 + $0x8] sm:$0xff] %vm53, %v52
    // Predicated region
    $region18: #{_lambda_.3} parent=1 // pred_check
      _
    $region19: #{_lambda_.3} parent=1 // pred_check_branch
      %57 = sbr.rel (0) target = $region21
    $region20: #{_lambda_.3} parent=1 // pred_region
      %s59 = ssub.s32 256, 256
      %60 = vsyncadd [#allocation4], %s59
      %s61 = sshll.u32 [#allocation5], 4
      %s62 = int_to_ptr.vmem [resolvable:$true] %s61
      %67 = dma.vmem_to_hbm [thread:$0]  %s62, 256, %s3, [#allocation4], 128, 128, 8
    $region21: #{_lambda_.3} parent=1 // pred_fallthru
      _
    // Predicated region
    $region22: #{_lambda_.3} parent=1 // pred_check
      _
    $region23: #{_lambda_.3} parent=1 // pred_check_branch
      %69 = sbr.rel (0) target = $region25
    $region24: #{_lambda_.3} parent=1 // pred_region
      %70 = dma.done [#allocation4], 256
    $region25: #{_lambda_.3} parent=1 // pred_fallthru
      _
    %71 = vsyncpa [#allocation3], 1
    %72 = vsyncpa [#allocation4], 1

// kernel: _lambda_.2
$region0: #{_lambda_.2}
  #allocation0 [shape = 'u32[]', space=smem, size = 0x4, offset = 0x4, fixed_abs, tag = 'smem constant byte address 0x4 - core index']
  #allocation1 [shape = 'u32[144,128]{1,0:T(1,128)}', space=vmem, size = 0x12000, scoped, tag = 'internal scratch']
  %s0 = inlined_call_operand.vmem [shape: f32[2,1,8,20], index: 0, kind: input, shape index: {}]
  %s1 = inlined_call_operand.vmem [shape: f32[8,40], index: 1, kind: input, shape index: {}]
  %s2 = inlined_call_operand.hbm [shape: f32[2,8,16], index: 2, kind: output, shape index: {0}]
  %s3 = inlined_call_operand.vmem [shape: f32[8,1], index: 3, kind: output, shape index: {1}]
  %s4 = inlined_call_operand.vmem [shape: f32[8,1], index: 4, kind: output, shape index: {2}]
  %5 = xla_tuple %s2, %s3, %s4
  %s6 = sld [smem:[#allocation0]]
  $region61: #{_lambda_.2} parent=0
    _
  %s8 = ssub.s32 1, %s6
  %s9 = scalar_select 0, %s8, %s6
  $region1: #{_lambda_.2} parent=0
    #allocation2 [shape = 'u8[8192]{0}', space=vmem, size = 0x2000, scoped, tag = 'output window, operand 0']
    #allocation3 [shape = 's32[2]{0}', space=sflag, size = 0x8, scoped, tag = 'scoped memory for _lambda_.2']
    %10 = vsyncpa [#allocation3], 0
    %s11 = scalar_lea.sflag [#allocation3], 1
    %12 = vsyncpa %s11, 0
    loop: start=0, step=1, limit=4
    $region2: #{_lambda_.2} parent=1 // loop_pre_header
      _
    $region3: #{_lambda_.2} parent=1 // loop_header
      %s14 = sphi 0, %s18
      %p15 = scmp.ge.s32.totalorder %s14, 4
      %s21 = sphi 0, %s33
      %s22 = sphi 0, %s29
      %s23 = sphi 0, %s21
      %s24 = sphi 0, %s22
      %s25 = sphi 0, %s23
      %s26 = sphi 0, %s24
      %s38 = sphi 0, %s40
      %s41 = sphi 0, %s38
      %s42 = sphi 0, %s41
      %s58 = sphi 0, %s42
      %s62 = sphi 0, %s62
      %s64 = sphi 0, %s62
      %s65 = sphi 0, %s64
      %s79 = sphi 0, %s65
      %s87 = sphi 0, %s89
      %s90 = sphi 0, %s87
      %s91 = sphi 0, %s90
      %s107 = sphi 0, %s91
      %s111 = sphi 0, %s111
      %s113 = sphi 0, %s111
      %s114 = sphi 0, %s113
      %s128 = sphi 0, %s114
      %s132 = sphi 0, %s132
      %s134 = sphi 0, %s132
      %s135 = sphi 0, %s134
      %s149 = sphi 0, %s135
    $region4: #{_lambda_.2} parent=1 // loop_header_branch
      %17 = sbr.rel (%p15) target = $region8
    $region5: #{_lambda_.2} parent=1 // loop_body
      %s19 = ssub.s32 %s14, 1
      %s20 = ssub.s32 %s14, 2
      %s27 = sadd.s32 1, %s22
      %p28 = scmp.ge.s32.totalorder %s27, 1
      %s29 = scalar_select %p28, 0, %s27
      %s30 = sadd.s32 1, %s21
      %s31 = scalar_select %p28, %s30, %s21
      %p32 = scmp.ge.s32.totalorder %s31, 2
      %s33 = scalar_select %p32, 0, %s31
      %s34 = ssub.s32 %s21, %s33
      %s35 = ssub.s32 %s22, %s29
      %s36 = sor.u32 %s34, %s35
      %p37 = scmp.eq.s32.totalorder %s36, 0
      %s39 = sadd.s32 %s38, 1
      %s40 = scalar_select %p37, %s38, %s39
      %p43 = pneg %p37
      %p44 = scmp.eq.s32.totalorder %s14, 1
      %p45 = por %p43, %p44
      %p46 = scmp.ne.s32.totalorder %s38, %s41
      %p47 = scmp.eq.s32.totalorder %s14, 0
      %p48 = por %p46, %p47
      %p49 = scmp.ne.s32.totalorder %s38, %s41
      %p50 = scmp.eq.s32.totalorder %s19, 1
      %p51 = por %p49, %p50
      %p52 = scmp.ne.s32.totalorder %s41, %s42
      %p53 = scmp.eq.s32.totalorder %s19, 0
      %p54 = por %p52, %p53
      %p55 = scmp.ne.s32.totalorder %s41, %s42
      %p56 = scmp.eq.s32.totalorder %s20, 1
      %p57 = por %p55, %p56
      %p59 = scmp.ne.s32.totalorder %s42, %s58
      %p60 = scmp.eq.s32.totalorder %s20, 0
      %p61 = por %p59, %p60
      %s63 = sadd.s32 %s62, 1
      %p66 = scmp.eq.s32.totalorder %s14, 1
      %p67 = scmp.ne.s32.totalorder %s62, %s64
      %p68 = scmp.eq.s32.totalorder %s14, 0
      %p69 = por %p67, %p68
      %p70 = scmp.ne.s32.totalorder %s62, %s64
      %p71 = scmp.eq.s32.totalorder %s19, 1
      %p72 = por %p70, %p71
      %p73 = scmp.ne.s32.totalorder %s64, %s65
      %p74 = scmp.eq.s32.totalorder %s19, 0
      %p75 = por %p73, %p74
      %p76 = scmp.ne.s32.totalorder %s64, %s65
      %p77 = scmp.eq.s32.totalorder %s20, 1
      %p78 = por %p76, %p77
      %p80 = scmp.ne.s32.totalorder %s65, %s79
      %p81 = scmp.eq.s32.totalorder %s20, 0
      %p82 = por %p80, %p81
      %s83 = ssub.s32 %s21, %s33
      %s84 = ssub.s32 %s22, %s29
      %s85 = sor.u32 %s83, %s84
      %p86 = scmp.eq.s32.totalorder %s85, 0
      %s88 = sadd.s32 %s87, 1
      %s89 = scalar_select %p86, %s87, %s88
      %p92 = pneg %p86
      %p93 = scmp.eq.s32.totalorder %s14, 1
      %p94 = por %p92, %p93
      %p95 = scmp.ne.s32.totalorder %s87, %s90
      %p96 = scmp.eq.s32.totalorder %s14, 0
      %p97 = por %p95, %p96
      %p98 = scmp.ne.s32.totalorder %s87, %s90
      %p99 = scmp.eq.s32.totalorder %s19, 1
      %p100 = por %p98, %p99
      %p101 = scmp.ne.s32.totalorder %s90, %s91
      %p102 = scmp.eq.s32.totalorder %s19, 0
      %p103 = por %p101, %p102
      %p104 = scmp.ne.s32.totalorder %s90, %s91
      %p105 = scmp.eq.s32.totalorder %s20, 1
      %p106 = por %p104, %p105
      %p108 = scmp.ne.s32.totalorder %s91, %s107
      %p109 = scmp.eq.s32.totalorder %s20, 0
      %p110 = por %p108, %p109
      %s112 = sadd.s32 %s111, 1
      %p115 = scmp.eq.s32.totalorder %s14, 1
      %p116 = scmp.ne.s32.totalorder %s111, %s113
      %p117 = scmp.eq.s32.totalorder %s14, 0
      %p118 = por %p116, %p117
      %p119 = scmp.ne.s32.totalorder %s111, %s113
      %p120 = scmp.eq.s32.totalorder %s19, 1
      %p121 = por %p119, %p120
      %p122 = scmp.ne.s32.totalorder %s113, %s114
      %p123 = scmp.eq.s32.totalorder %s19, 0
      %p124 = por %p122, %p123
      %p125 = scmp.ne.s32.totalorder %s113, %s114
      %p126 = scmp.eq.s32.totalorder %s20, 1
      %p127 = por %p125, %p126
      %p129 = scmp.ne.s32.totalorder %s114, %s128
      %p130 = scmp.eq.s32.totalorder %s20, 0
      %p131 = por %p129, %p130
      %s133 = sadd.s32 %s132, 1
      %p136 = scmp.eq.s32.totalorder %s14, 1
      %p137 = scmp.ne.s32.totalorder %s132, %s134
      %p138 = scmp.eq.s32.totalorder %s14, 0
      %p139 = por %p137, %p138
      %p140 = scmp.ne.s32.totalorder %s132, %s134
      %p141 = scmp.eq.s32.totalorder %s19, 1
      %p142 = por %p140, %p141
      %p143 = scmp.ne.s32.totalorder %s134, %s135
      %p144 = scmp.eq.s32.totalorder %s19, 0
      %p145 = por %p143, %p144
      %p146 = scmp.ne.s32.totalorder %s134, %s135
      %p147 = scmp.eq.s32.totalorder %s20, 1
      %p148 = por %p146, %p147
      %p150 = scmp.ne.s32.totalorder %s135, %s149
      %p151 = scmp.eq.s32.totalorder %s20, 0
      %p152 = por %p150, %p151
      %p153 = scmp.le.s32.totalorder 1, %s14
      %p154 = scmp.lt.s32.totalorder %s14, 3
      %p155 = pnand %p153, %p154
      %p156 = pneg %p155
      // Predicated region
      $region9: #{_lambda_.2} parent=5 // pred_check
        _
      $region10: #{_lambda_.2} parent=5 // pred_check_branch
        %158 = sbr.rel (%p155) target = $region12
      $region11: #{_lambda_.2} parent=5 // pred_region
        %s159 = ssub.s32 %s14, 1
        // Predicated region
        $region13: #{_lambda_.2} parent=11 // pred_check
          %p160 = pneg %p75
        $region14: #{_lambda_.2} parent=11 // pred_check_branch
          %162 = sbr.rel (%p160) target = $region16
        $region15: #{_lambda_.2} parent=11 // pred_region
          _
        $region16: #{_lambda_.2} parent=11 // pred_fallthru
          _
      $region12: #{_lambda_.2} parent=5 // pred_fallthru
        _
      %p163 = scmp.lt.s32.totalorder %s14, 2
      // Predicated region
      $region17: #{_lambda_.2} parent=5 // pred_check
        %p164 = pneg %p163
      $region18: #{_lambda_.2} parent=5 // pred_check_branch
        %166 = sbr.rel (%p164) target = $region20
      $region19: #{_lambda_.2} parent=5 // pred_region
        // Predicated region
        $region21: #{_lambda_.2} parent=19 // pred_check
          %p167 = pneg %p48
        $region22: #{_lambda_.2} parent=19 // pred_check_branch
          %169 = sbr.rel (%p167) target = $region24
        $region23: #{_lambda_.2} parent=19 // pred_region
          %p170 = scmp.lt.s32.totalorder %s21, 1
          %s171 = scalar_select %p170, %s21, 1
          %p172 = scmp.lt.s32.totalorder %s22, 0
          %s173 = scalar_select %p172, %s22, 0
          %s174 = sadd.s32 %s173, %s171
          %s175 = smul.addr %s174, 8
          %s176 = scalar_lea.vmem %s0, %s175
        $region24: #{_lambda_.2} parent=19 // pred_fallthru
          _
      $region20: #{_lambda_.2} parent=5 // pred_fallthru
        _
      %p177 = scmp.le.s32.totalorder 1, %s14
      %p178 = scmp.lt.s32.totalorder %s14, 3
      %p179 = pnand %p177, %p178
      %p180 = pneg %p179
      // Predicated region
      $region25: #{_lambda_.2} parent=5 // pred_check
        _
      $region26: #{_lambda_.2} parent=5 // pred_check_branch
        %182 = sbr.rel (%p179) target = $region28
      $region27: #{_lambda_.2} parent=5 // pred_region
        %s183 = ssub.s32 %s14, 1
        %p184 = scmp.lt.s32.totalorder %s23, 1
        %s185 = scalar_select %p184, %s23, 1
        %p186 = scmp.lt.s32.totalorder %s24, 0
        %s187 = scalar_select %p186, %s24, 0
        %s188 = sadd.s32 %s187, %s185
        %s189 = smul.addr %s188, 8
        %s190 = scalar_lea.vmem %s0, %s189
        %p191 = pneg %p54
        %p192 = pneg %p51
        %p193 = pneg %p75
        %p194 = pneg %p72
        %p195 = pneg %p103
        %p196 = pneg %p100
        %s197 = sand.u32 %s90, 1
        %s198 = scalar_lea.sflag [#allocation3], %s197
        %s199 = sand.u32 %s90, 1
        %s200 = smul.addr %s199, 8
        %s201 = scalar_lea.vmem [#allocation2], %s200
        %p202 = pneg %p124
        %p203 = pneg %p121
        %p204 = pneg %p145
        %p205 = pneg %p142
        %p206 = scmp.lt.s32.totalorder %s23, 1
        %s207 = scalar_select %p206, %s23, 1
        %p208 = scmp.lt.s32.totalorder %s24, 0
        %s209 = scalar_select %p208, %s24, 0
        %s210 = sadd.s32 %s209, %s207
        %s211 = smul.addr %s210, 8
        %s212 = scalar_lea.vmem %s0, %s211
        %p213 = scmp.eq.s32.totalorder %s23, 0
        %p214 = scmp.eq.s32.totalorder %s24, 0
        %p215 = pnand %p213, %p214
        %p216 = pneg %p215
        // Predicated region
        $region29: #{_lambda_.2} parent=27 // pred_check
          _
        $region30: #{_lambda_.2} parent=27 // pred_check_branch
          %218 = sbr.rel (%p215) target = $region32
        $region31: #{_lambda_.2} parent=27 // pred_region
          %vm219 = vcmask 7168
          %220 = vst.msk [vmem:[%s3] sm:$0xff] %vm219, 0.0
          %221 = vst.msk [vmem:[%s4] sm:$0xff] %vm219, 0.0
        $region32: #{_lambda_.2} parent=27 // pred_fallthru
          _
        %v222 = vld [vmem:[%s212] sm:$0xff]
        %224 = vrot.lane.b32.xlu0 %v222, 127
        %v225 = vpop.permute.xlu0 %224
        %227 = vrot.lane.b32.xlu0 %v222, 126
        %v228 = vpop.permute.xlu0 %227
        %230 = vrot.lane.b32.xlu0 %v222, 125
        %v231 = vpop.permute.xlu0 %230
        %233 = vrot.lane.b32.xlu0 %v222, 124
        %v234 = vpop.permute.xlu0 %233
        %v236 = vld [vmem:[%s1] sm:$0xff]
        %vm237 = vcmask 326656
        %v239 = vsel %vm237, %v236, 0
        %241 = vmatprep.subr.mxu0 0.0
        %242 = vmatpush1.msra.mxu0 0.0
        %243 = vmatprep.subr.mxu0 0.0
        %244 = vmatpush1.msra.mxu0 0.0
        %245 = vmatprep.subr.mxu0 0.0
        %246 = vmatpush1.msra.mxu0 0.0
        %247 = vmatprep.subr.mxu0 0.0
        %248 = vmatpush1.msra.mxu0 0.0
        %249 = vmatprep.subr.mxu0 0.0
        %250 = vmatpush1.msra.mxu0 0.0
        %251 = vmatprep.subr.mxu0 0.0
        %252 = vmatpush1.msra.mxu0 0.0
        %253 = vmatprep.subr.mxu0 0.0
        %254 = vmatpush1.msra.mxu0 0.0
        %255 = vmatprep.subr.mxu0 0.0
        %256 = vmatpush1.msra.mxu0 0.0
        %257 = vmatprep.subr.mxu0 0.0
        %258 = vmatpush1.msra.mxu0 0.0
        %259 = vmatprep.subr.mxu0 0.0
        %260 = vmatpush1.msra.mxu0 0.0
        %261 = vmatprep.subr.mxu0 0.0
        %262 = vmatpush1.msra.mxu0 0.0
        %263 = vmatprep.subr.mxu0 0.0
        %264 = vmatpush1.msra.mxu0 %v234
        %265 = vmatprep.subr.mxu0 0.0
        %266 = vmatpush1.msra.mxu0 %v231
        %267 = vmatprep.subr.mxu0 0.0
        %268 = vmatpush1.msra.mxu0 %v228
        %269 = vmatprep.subr.mxu0 0.0
        %270 = vmatpush1.msra.mxu0 %v225
        %271 = vmatprep.subr.mxu0 0.0
        %272 = vmatpush1.msra.mxu0 %v222
        %273 = vmatprep.subr.mxu0 0.0
        %274 = vmatpush2.msra.mxu0 0.0
        %275 = vmatprep.subr.mxu0 0.0
        %276 = vmatpush2.msra.mxu0 0.0
        %277 = vmatprep.subr.mxu0 0.0
        %278 = vmatpush2.msra.mxu0 0.0
        %279 = vmatprep.subr.mxu0 0.0
        %280 = vmatpush2.msra.mxu0 0.0
        %281 = vmatprep.subr.mxu0 0.0
        %282 = vmatpush2.msra.mxu0 0.0
        %283 = vmatprep.subr.mxu0 0.0
        %284 = vmatpush2.msra.mxu0 0.0
        %285 = vmatprep.subr.mxu0 0.0
        %286 = vmatpush2.msra.mxu0 0.0
        %287 = vmatprep.subr.mxu0 0.0
        %288 = vmatpush2.msra.mxu0 0.0
        %289 = vmatprep.subr.mxu0 0.0
        %290 = vmatpush2.msra.mxu0 0.0
        %291 = vmatprep.subr.mxu0 0.0
        %292 = vmatpush2.msra.mxu0 0.0
        %293 = vmatprep.subr.mxu0 0.0
        %294 = vmatpush2.msra.mxu0 0.0
        %295 = vmatprep.subr.mxu0 0.0
        %296 = vmatpush2.msra.mxu0 0.0
        %297 = vmatprep.subr.mxu0 0.0
        %298 = vmatpush2.msra.mxu0 0.0
        %299 = vmatprep.subr.mxu0 0.0
        %300 = vmatpush2.msra.mxu0 0.0
        %301 = vmatprep.subr.mxu0 0.0
        %302 = vmatpush2.msra.mxu0 0.0
        %303 = vmatprep.subr.mxu0 0.0
        %304 = vmatpush2.msra.mxu0 0.0
        %305 = vmatprep.mubr.f32.mxu0 0.0
        %306 = vmatmul.mubr.f32.gmra.mxu0 %v239
        %v307 = vpop.f32.mrf.mxu0
        %v308 = vadd.f32 0.0, %v307
        %v309 = vpop.f32.mrf.mxu0
        %310 = vdwg.mxu0
        %vm311 = vcmask 130048
        %312 = vst.msk [vmem:[%s201] sm:$0xff] %vm311, %v308
        %v313 = vld [vmem:[%s3] sm:$0xff]
        %v314 = vsel %vm311, %v308, 0.0
        %315 = vadd.xlane.f32.xlu0 %v314
        %v316 = vpop.xlane.xlu0 %315
        %v317 = vadd.f32 %v313, %v316
        %vm318 = vcmask 7168
        %319 = vst.msk [vmem:[%s3] sm:$0xff] %vm318, %v317
        %v320 = vld [vmem:[%s4] sm:$0xff]
        %v321 = vmul.f32 %v308, %v308
        %v322 = vsel %vm311, %v321, 0.0
        %323 = vadd.xlane.f32.xlu0 %v322
        %v324 = vpop.xlane.xlu0 %323
        %v325 = vadd.f32 %v320, %v324
        %326 = vst.msk [vmem:[%s4] sm:$0xff] %vm318, %v325
        %s327 = sand.u32 %s90, 1
        %s328 = scalar_lea.sflag [#allocation3], %s327
        %s329 = sand.u32 %s90, 1
        %s330 = smul.addr %s329, 8
        %s331 = scalar_lea.vmem [#allocation2], %s330
        // Predicated region
        $region33: #{_lambda_.2} parent=27 // pred_check
          %p332 = pneg %p100
        $region34: #{_lambda_.2} parent=27 // pred_check_branch
          %334 = sbr.rel (%p332) target = $region36
        $region35: #{_lambda_.2} parent=27 // pred_region
          %s336 = ssub.s32 128, 128
          %337 = vsyncadd %s328, %s336
          %s338 = sadd.s32 %s24, %s23
          %s339 = smul.addr %s338, 128
          %s340 = scalar_lea.hbm %s2, %s339
          %s342 = sshll.u32 %s331, 4
          %s343 = int_to_ptr.vmem [resolvable:$true] %s342
          %345 = dma.vmem_to_hbm [thread:$0]  %s343, 128, %s340, %s328
        $region36: #{_lambda_.2} parent=27 // pred_fallthru
          _
        // Predicated region
        $region37: #{_lambda_.2} parent=27 // pred_check
          %p346 = pneg %p121
        $region38: #{_lambda_.2} parent=27 // pred_check_branch
          %348 = sbr.rel (%p346) target = $region40
        $region39: #{_lambda_.2} parent=27 // pred_region
          _
        $region40: #{_lambda_.2} parent=27 // pred_fallthru
          _
        // Predicated region
        $region41: #{_lambda_.2} parent=27 // pred_check
          %p349 = pneg %p142
        $region42: #{_lambda_.2} parent=27 // pred_check_branch
          %351 = sbr.rel (%p349) target = $region44
        $region43: #{_lambda_.2} parent=27 // pred_region
          _
        $region44: #{_lambda_.2} parent=27 // pred_fallthru
          _
        // Predicated region
        $region45: #{_lambda_.2} parent=27 // pred_check
          %p352 = pneg %p121
        $region46: #{_lambda_.2} parent=27 // pred_check_branch
          %354 = sbr.rel (%p352) target = $region48
        $region47: #{_lambda_.2} parent=27 // pred_region
          _
        $region48: #{_lambda_.2} parent=27 // pred_fallthru
          _
        // Predicated region
        $region49: #{_lambda_.2} parent=27 // pred_check
          %p355 = pneg %p142
        $region50: #{_lambda_.2} parent=27 // pred_check_branch
          %357 = sbr.rel (%p355) target = $region52
        $region51: #{_lambda_.2} parent=27 // pred_region
          _
        $region52: #{_lambda_.2} parent=27 // pred_fallthru
          _
      $region28: #{_lambda_.2} parent=5 // pred_fallthru
        _
      %p358 = scmp.le.s32.totalorder 2, %s14
      // Predicated region
      $region53: #{_lambda_.2} parent=5 // pred_check
        %p359 = pneg %p358
      $region54: #{_lambda_.2} parent=5 // pred_check_branch
        %361 = sbr.rel (%p359) target = $region56
      $region55: #{_lambda_.2} parent=5 // pred_region
        %s362 = ssub.s32 %s14, 2
        // Predicated region
        $region57: #{_lambda_.2} parent=55 // pred_check
          %p363 = pneg %p106
        $region58: #{_lambda_.2} parent=55 // pred_check_branch
          %365 = sbr.rel (%p363) target = $region60
        $region59: #{_lambda_.2} parent=55 // pred_region
          %s366 = sand.u32 %s91, 1
          %s367 = scalar_lea.sflag [#allocation3], %s366
          %s368 = sand.u32 %s91, 1
          %s369 = smul.addr %s368, 8
          %s370 = scalar_lea.vmem [#allocation2], %s369
          %371 = dma.done %s367, 128
        $region60: #{_lambda_.2} parent=55 // pred_fallthru
          _
      $region56: #{_lambda_.2} parent=5 // pred_fallthru
        _
    $region6: #{_lambda_.2} parent=1 // loop_footer
      %s18 = sadd.s32 1, %s14
    $region7: #{_lambda_.2} parent=1 // loop_footer_branch
      %13 = sbr.rel target = $region3
    $region8: #{_lambda_.2} parent=1 // loop_exit
      _
    %372 = vsyncpa [#allocation3], 1
    %s373 = scalar_lea.sflag [#allocation3], 1
    %374 = vsyncpa %s373, 1

</llo_original>
